<compile_context>
chip_gen: v7x
topology: tpu7x:2x2x1
jax: 0.10.0
libtpu: 0.0.40
codegen_flags: <defaults>
</compile_context>

<pallas_src>
import jax
import jax.numpy as jnp
from jax.experimental import pallas as pl
from jax.experimental.pallas import tpu as pltpu

F1, F2 = 50, 50       # out_channels of conv1 / conv2
K1, K2 = 2, 4         # kernel heights of conv1 / conv2
DP = 128              # embedding dim padded to 128 lanes
FP = 128              # combined filter count padded to 128 lanes
NEG = jnp.float32(-1e30)


def _round_up(x, m):
    return (x + m - 1) // m * m


def _cnn_kernel(emb_ref, wcat_ref, bcat_ref, wfc8_ref, tmask_ref, bfc_ref, out_ref):
    # emb_ref: (N, TB, 128) bf16, sequence-first; wcat_ref: (K2, 128, 128) bf16
    N, TB, Dp = emb_ref.shape
    npos2 = N - K2 + 1          # positions where all 4 taps are valid
    ntail = K2 - K1             # extra conv1-only positions at the sequence tail

    # --- main positions: tap-wise accumulated matmuls, M = npos2*TB, K = 128 ---
    acc = jnp.dot(emb_ref[pl.ds(0, npos2)].reshape(npos2 * TB, Dp), wcat_ref[0],
                  preferred_element_type=jnp.float32)
    for j in range(1, K2):
        acc += jnp.dot(emb_ref[pl.ds(j, npos2)].reshape(npos2 * TB, Dp), wcat_ref[j],
                       preferred_element_type=jnp.float32)
    m = jnp.max(acc.reshape(npos2, TB, FP), axis=0)              # (TB, 128)

    # --- tail positions: conv1 taps only; conv2 lanes masked out of the max ---
    acc_t = jnp.dot(emb_ref[pl.ds(npos2, ntail)].reshape(ntail * TB, Dp), wcat_ref[0],
                    preferred_element_type=jnp.float32)
    for j in range(1, K1):
        acc_t += jnp.dot(emb_ref[pl.ds(npos2 + j, ntail)].reshape(ntail * TB, Dp),
                         wcat_ref[j], preferred_element_type=jnp.float32)
    m_t = jnp.max(acc_t.reshape(ntail, TB, FP), axis=0) + tmask_ref[...]
    m = jnp.maximum(m, m_t)                                      # (TB, 128)

    # Global max pool done; bias + ReLU after the pool (bias is position
    # invariant, ReLU is monotone) so the VPU epilogue runs on (TB,128).
    h = jnp.maximum(m + bcat_ref[...], 0.0)                      # (TB, 128) f32

    # fc(100->1) + batch "transpose" in one MXU call:
    #   (8,128) x (TB,128)^T -> (8, TB); all 8 rows carry the same logits.
    logits = jax.lax.dot_general(
        wfc8_ref[...], h, (((1,), (1,)), ((), ())),
        preferred_element_type=jnp.float32) + bfc_ref[0, 0]      # (8, TB)
    out_ref[...] = jax.nn.sigmoid(logits)[None]                  # (1, 8, TB) lane-dense


def pack_params(params):
    """One-time packing: lane-padded bf16 table / conv weights, fc row, masks."""
    emb_table, w1, b1, w2, b2, wfc, bfc = params
    V, D = emb_table.shape
    assert D == F1 + F2, "fc = Linear(embedding_dim, 1) requires embedding_dim == 100"

    table = jnp.zeros((V, DP), jnp.float32).at[:, :D].set(emb_table)
    table = table.astype(jnp.bfloat16)                           # (V, 128) bf16

    wcat = jnp.zeros((K2, DP, FP), jnp.float32)
    wcat = wcat.at[:K1, :D, :F1].set(w1)                         # conv1 -> taps 0..1, lanes 0..49
    wcat = wcat.at[:, :D, F1:F1 + F2].set(w2)                    # conv2 -> taps 0..3, lanes 50..99
    wcat = wcat.astype(jnp.bfloat16)

    bcat = jnp.zeros((1, FP), jnp.float32)
    bcat = bcat.at[:, :F1].set(b1).at[:, F1:F1 + F2].set(b2)

    wfc8 = jnp.zeros((8, FP), jnp.float32).at[:, :D].set(
        jnp.broadcast_to(wfc[:, 0], (8, D)))                     # fc row replicated to 8 sublanes
    tmask = jnp.where(jnp.arange(FP) < F1, 0.0, NEG).astype(jnp.float32).reshape(1, FP)
    bfc2 = jnp.reshape(bfc, (1, 1)).astype(jnp.float32)
    return table, wcat, bcat, wfc8, tmask, bfc2


def cnn_forward(x_tokens, packed):
    """x_tokens: (N, B) int32 token ids (sequence-first, torchtext convention)."""
    table, wcat, bcat, wfc8, tmask, bfc2 = packed
    N, B = x_tokens.shape
    assert N >= K2, "sequence must be at least as long as the largest conv kernel"
    npos2 = N - K2 + 1

    # ---- batch-tile sizing: budget the real per-step live set ----------------
    # double-buffered bf16 emb tile + f32 main accumulator + bf16 tap slice + small
    row_bytes = 2 * (N * DP * 2) + npos2 * (FP * 4 + DP * 2) + K2 * FP * 4 + 1024
    tb_cap = max(16, min(1024, ((20 << 20) // row_bytes) // 16 * 16))
    num_tiles = max(1, -(-B // tb_cap))
    if num_tiles == 1 and B >= 256:
        num_tiles = 2                      # let v7x shard grid steps across its 2 TCs
    tb = _round_up(-(-B // num_tiles), 16)
    b_pad = num_tiles * tb

    # ---- glue: only the gather touches the big activation (already bf16/128) -
    tok = x_tokens
    if b_pad != B:
        tok = jnp.pad(x_tokens, ((0, 0), (0, b_pad - B)))        # pad with token id 0
    emb = jnp.take(table, tok, axis=0)                           # (N, b_pad, 128) bf16

    out = pl.pallas_call(
        _cnn_kernel,
        out_shape=jax.ShapeDtypeStruct((num_tiles, 8, tb), jnp.float32),
        grid=(num_tiles,),
        in_specs=[
            pl.BlockSpec((N, tb, DP), lambda i: (0, i, 0)),      # emb, batch-tiled on middle axis
            pl.BlockSpec((K2, DP, FP), lambda i: (0, 0, 0)),     # per-tap conv weights (bf16)
            pl.BlockSpec((1, FP), lambda i: (0, 0)),             # combined conv bias
            pl.BlockSpec((8, FP), lambda i: (0, 0)),             # fc weight row (replicated x8)
            pl.BlockSpec((1, FP), lambda i: (0, 0)),             # conv2 tail lane mask
            pl.BlockSpec(memory_space=pltpu.MemorySpace.SMEM),   # fc bias scalar
        ],
        out_specs=pl.BlockSpec((1, 8, tb), lambda i: (i, 0, 0)), # lane-dense output
        compiler_params=pltpu.CompilerParams(
            dimension_semantics=("parallel",),
            vmem_limit_bytes=48 << 20),
    )(emb, wcat, bcat, wfc8, tmask, bfc2)
    return out[:, 0, :].reshape(-1)[:B]                          # (B,)


def cnn_reference(x_tokens, params):
    """Pure-JAX f32 reference mirroring the PyTorch forward exactly."""
    emb_table, w1, b1, w2, b2, wfc, bfc = params
    emb = jnp.take(emb_table, x_tokens, axis=0)                  # (N, B, D)
    emb = jnp.transpose(emb, (1, 0, 2))                          # (B, N, D)
    B, N, D = emb.shape

    def branch(w, bias, k):
        w_mat = w.reshape(k * D, -1)                             # (k*D, F)
        outs = []
        for t in range(N - k + 1):
            win = emb[:, t:t + k, :].reshape(B, k * D)
            outs.append(win @ w_mat + bias)                      # (B, F)
        s = jnp.stack(outs, axis=1)                              # (B, npos, F)
        return jnp.max(jax.nn.relu(s), axis=1)                   # (B, F)

    a = branch(w1, b1, K1)
    b = branch(w2, b2, K2)
    cat = jnp.concatenate([a, b], axis=1)                        # (B, 100)
    return jax.nn.sigmoid(cat @ wfc + bfc)[:, 0]                 # (B,)


if __name__ == "__main__":
    # Small, deterministic synthetic setup.
    V, D = 20, 100      # embedding_dim must be 100 for the fc to type-check
    N, B = 8, 2         # seq length (>= 4 for conv2), batch

    key = jax.random.PRNGKey(0)
    k_emb, k_w1, k_b1, k_w2, k_b2, k_wfc, k_bfc, k_x = jax.random.split(key, 8)

    emb_table = jax.random.normal(k_emb, (V, D), jnp.float32) * 0.5
    # Conv2d(1, 50, (k, D)) weight (50, 1, k, D) stored as (k, D, 50).
    w1 = jax.random.normal(k_w1, (K1, D, F1), jnp.float32) * 0.1
    b1 = jax.random.normal(k_b1, (1, F1), jnp.float32) * 0.1
    w2 = jax.random.normal(k_w2, (K2, D, F2), jnp.float32) * 0.1
    b2 = jax.random.normal(k_b2, (1, F2), jnp.float32) * 0.1
    # Linear(100, 1) weight stored transposed as (100, 1).
    wfc = jax.random.normal(k_wfc, (F1 + F2, 1), jnp.float32) * 0.1
    bfc = jax.random.normal(k_bfc, (1, 1), jnp.float32) * 0.1

    params = (emb_table, w1, b1, w2, b2, wfc, bfc)
    x_tokens = jax.random.randint(k_x, (N, B), 0, V, jnp.int32)

    packed = pack_params(params)
    forward = jax.jit(cnn_forward)
    out = jax.block_until_ready(forward(x_tokens, packed))
    ref = jax.block_until_ready(cnn_reference(x_tokens, params))

    assert out.shape == (B,), out.shape
    # bf16 matmul inputs with f32 accumulation -> slightly looser tolerance.
    assert jnp.allclose(out, ref, atol=1e-2, rtol=1e-2), (out, ref)
    print("KERNEL_OK")
</pallas_src>

<mosaic_0001>
module attributes {stable_mosaic.version = 11 : i64} {
  func.func @_cnn_kernel(%arg0: i32, %arg1: memref<8x16x128xbf16, #tpu.memory_space<vmem>>, %arg2: memref<4x128x128xbf16, #tpu.memory_space<vmem>>, %arg3: memref<1x128xf32, #tpu.memory_space<vmem>>, %arg4: memref<8x128xf32, #tpu.memory_space<vmem>>, %arg5: memref<1x128xf32, #tpu.memory_space<vmem>>, %arg6: memref<1x1xf32, #tpu.memory_space<smem>>, %arg7: memref<1x8x16xf32, #tpu.memory_space<vmem>>) attributes {dimension_semantics = [#tpu.dimension_semantics<parallel>], iteration_bounds = array<i64: 1>, scalar_prefetch = 0 : i64, scratch_operands = 0 : i64, tpu.core_type = #tpu.core_type<tc>, window_params = [{transform_indices = @transform_0, window_bounds = array<i64: 8, 16, 128>}, {pipeline_mode = #tpu.pipeline_mode<synchronous>, transform_indices = @transform_1, window_bounds = array<i64: 4, 128, 128>}, {pipeline_mode = #tpu.pipeline_mode<synchronous>, transform_indices = @transform_2, window_bounds = array<i64: 1, 128>}, {pipeline_mode = #tpu.pipeline_mode<synchronous>, transform_indices = @transform_3, window_bounds = array<i64: 8, 128>}, {pipeline_mode = #tpu.pipeline_mode<synchronous>, transform_indices = @transform_4, window_bounds = array<i64: 1, 128>}, {transform_indices = @transform_5, window_bounds = array<i64: 1, 1>}, {transform_indices = @transform_6, window_bounds = array<i64: 1, 8, 16>}]} {
    %c0 = arith.constant 0 : index
    %c0_0 = arith.constant 0 : index
    %c0_1 = arith.constant 0 : index
    %0 = vector.load %arg1[%c0, %c0_0, %c0_1] : memref<8x16x128xbf16, #tpu.memory_space<vmem>>, vector<5x16x128xbf16>
    %1 = vector.shape_cast %0 : vector<5x16x128xbf16> to vector<80x128xbf16>
    %c0_2 = arith.constant 0 : index
    %c0_3 = arith.constant 0 : index
    %c0_4 = arith.constant 0 : index
    %2 = vector.load %arg2[%c0_2, %c0_3, %c0_4] : memref<4x128x128xbf16, #tpu.memory_space<vmem>>, vector<1x128x128xbf16>
    %3 = vector.shape_cast %2 : vector<1x128x128xbf16> to vector<128x128xbf16>
    %cst = arith.constant dense<0.000000e+00> : vector<80x128xf32>
    %4 = tpu.matmul %1, %3, %cst {dimension_numbers = #tpu.dot_dimension_numbers<[1], [0], [0], [1], [0, 0, 1, 1], [], []>} : vector<80x128xbf16>, vector<128x128xbf16>, vector<80x128xf32> -> vector<80x128xf32>
    %c1 = arith.constant 1 : index
    %c0_5 = arith.constant 0 : index
    %c0_6 = arith.constant 0 : index
    %5 = vector.load %arg1[%c1, %c0_5, %c0_6] : memref<8x16x128xbf16, #tpu.memory_space<vmem>>, vector<5x16x128xbf16>
    %6 = vector.shape_cast %5 : vector<5x16x128xbf16> to vector<80x128xbf16>
    %c1_7 = arith.constant 1 : index
    %c0_8 = arith.constant 0 : index
    %c0_9 = arith.constant 0 : index
    %7 = vector.load %arg2[%c1_7, %c0_8, %c0_9] : memref<4x128x128xbf16, #tpu.memory_space<vmem>>, vector<1x128x128xbf16>
    %8 = vector.shape_cast %7 : vector<1x128x128xbf16> to vector<128x128xbf16>
    %cst_10 = arith.constant dense<0.000000e+00> : vector<80x128xf32>
    %9 = tpu.matmul %6, %8, %cst_10 {dimension_numbers = #tpu.dot_dimension_numbers<[1], [0], [0], [1], [0, 0, 1, 1], [], []>} : vector<80x128xbf16>, vector<128x128xbf16>, vector<80x128xf32> -> vector<80x128xf32>
    %10 = arith.addf %4, %9 : vector<80x128xf32>
    %c2 = arith.constant 2 : index
    %c0_11 = arith.constant 0 : index
    %c0_12 = arith.constant 0 : index
    %11 = vector.load %arg1[%c2, %c0_11, %c0_12] : memref<8x16x128xbf16, #tpu.memory_space<vmem>>, vector<5x16x128xbf16>
    %12 = vector.shape_cast %11 : vector<5x16x128xbf16> to vector<80x128xbf16>
    %c2_13 = arith.constant 2 : index
    %c0_14 = arith.constant 0 : index
    %c0_15 = arith.constant 0 : index
    %13 = vector.load %arg2[%c2_13, %c0_14, %c0_15] : memref<4x128x128xbf16, #tpu.memory_space<vmem>>, vector<1x128x128xbf16>
    %14 = vector.shape_cast %13 : vector<1x128x128xbf16> to vector<128x128xbf16>
    %cst_16 = arith.constant dense<0.000000e+00> : vector<80x128xf32>
    %15 = tpu.matmul %12, %14, %cst_16 {dimension_numbers = #tpu.dot_dimension_numbers<[1], [0], [0], [1], [0, 0, 1, 1], [], []>} : vector<80x128xbf16>, vector<128x128xbf16>, vector<80x128xf32> -> vector<80x128xf32>
    %16 = arith.addf %10, %15 : vector<80x128xf32>
    %c3 = arith.constant 3 : index
    %c0_17 = arith.constant 0 : index
    %c0_18 = arith.constant 0 : index
    %17 = vector.load %arg1[%c3, %c0_17, %c0_18] : memref<8x16x128xbf16, #tpu.memory_space<vmem>>, vector<5x16x128xbf16>
    %18 = vector.shape_cast %17 : vector<5x16x128xbf16> to vector<80x128xbf16>
    %c3_19 = arith.constant 3 : index
    %c0_20 = arith.constant 0 : index
    %c0_21 = arith.constant 0 : index
    %19 = vector.load %arg2[%c3_19, %c0_20, %c0_21] : memref<4x128x128xbf16, #tpu.memory_space<vmem>>, vector<1x128x128xbf16>
    %20 = vector.shape_cast %19 : vector<1x128x128xbf16> to vector<128x128xbf16>
    %cst_22 = arith.constant dense<0.000000e+00> : vector<80x128xf32>
    %21 = tpu.matmul %18, %20, %cst_22 {dimension_numbers = #tpu.dot_dimension_numbers<[1], [0], [0], [1], [0, 0, 1, 1], [], []>} : vector<80x128xbf16>, vector<128x128xbf16>, vector<80x128xf32> -> vector<80x128xf32>
    %22 = arith.addf %16, %21 : vector<80x128xf32>
    %23 = vector.shape_cast %22 : vector<80x128xf32> to vector<5x16x128xf32>
    %cst_23 = arith.constant dense<0xFF800000> : vector<16x128xf32>
    %24 = vector.multi_reduction <maximumf>, %23, %cst_23 [0] : vector<5x16x128xf32> to vector<16x128xf32>
    %c5 = arith.constant 5 : index
    %c0_24 = arith.constant 0 : index
    %c0_25 = arith.constant 0 : index
    %25 = vector.load %arg1[%c5, %c0_24, %c0_25] : memref<8x16x128xbf16, #tpu.memory_space<vmem>>, vector<2x16x128xbf16>
    %26 = vector.shape_cast %25 : vector<2x16x128xbf16> to vector<32x128xbf16>
    %c0_26 = arith.constant 0 : index
    %c0_27 = arith.constant 0 : index
    %c0_28 = arith.constant 0 : index
    %27 = vector.load %arg2[%c0_26, %c0_27, %c0_28] : memref<4x128x128xbf16, #tpu.memory_space<vmem>>, vector<1x128x128xbf16>
    %28 = vector.shape_cast %27 : vector<1x128x128xbf16> to vector<128x128xbf16>
    %cst_29 = arith.constant dense<0.000000e+00> : vector<32x128xf32>
    %29 = tpu.matmul %26, %28, %cst_29 {dimension_numbers = #tpu.dot_dimension_numbers<[1], [0], [0], [1], [0, 0, 1, 1], [], []>} : vector<32x128xbf16>, vector<128x128xbf16>, vector<32x128xf32> -> vector<32x128xf32>
    %c6 = arith.constant 6 : index
    %c0_30 = arith.constant 0 : index
    %c0_31 = arith.constant 0 : index
    %30 = vector.load %arg1[%c6, %c0_30, %c0_31] : memref<8x16x128xbf16, #tpu.memory_space<vmem>>, vector<2x16x128xbf16>
    %31 = vector.shape_cast %30 : vector<2x16x128xbf16> to vector<32x128xbf16>
    %c1_32 = arith.constant 1 : index
    %c0_33 = arith.constant 0 : index
    %c0_34 = arith.constant 0 : index
    %32 = vector.load %arg2[%c1_32, %c0_33, %c0_34] : memref<4x128x128xbf16, #tpu.memory_space<vmem>>, vector<1x128x128xbf16>
    %33 = vector.shape_cast %32 : vector<1x128x128xbf16> to vector<128x128xbf16>
    %cst_35 = arith.constant dense<0.000000e+00> : vector<32x128xf32>
    %34 = tpu.matmul %31, %33, %cst_35 {dimension_numbers = #tpu.dot_dimension_numbers<[1], [0], [0], [1], [0, 0, 1, 1], [], []>} : vector<32x128xbf16>, vector<128x128xbf16>, vector<32x128xf32> -> vector<32x128xf32>
    %35 = arith.addf %29, %34 : vector<32x128xf32>
    %36 = vector.shape_cast %35 : vector<32x128xf32> to vector<2x16x128xf32>
    %cst_36 = arith.constant dense<0xFF800000> : vector<16x128xf32>
    %37 = vector.multi_reduction <maximumf>, %36, %cst_36 [0] : vector<2x16x128xf32> to vector<16x128xf32>
    %c0_37 = arith.constant 0 : index
    %c0_38 = arith.constant 0 : index
    %38 = vector.load %arg5[%c0_37, %c0_38] : memref<1x128xf32, #tpu.memory_space<vmem>>, vector<1x128xf32>
    %39 = vector.broadcast %38 : vector<1x128xf32> to vector<16x128xf32>
    %40 = arith.addf %37, %39 : vector<16x128xf32>
    %41 = arith.maximumf %24, %40 : vector<16x128xf32>
    %c0_39 = arith.constant 0 : index
    %c0_40 = arith.constant 0 : index
    %42 = vector.load %arg3[%c0_39, %c0_40] : memref<1x128xf32, #tpu.memory_space<vmem>>, vector<1x128xf32>
    %43 = vector.broadcast %42 : vector<1x128xf32> to vector<16x128xf32>
    %44 = arith.addf %41, %43 : vector<16x128xf32>
    %cst_41 = arith.constant 0.000000e+00 : f32
    %45 = vector.broadcast %cst_41 : f32 to vector<16x128xf32>
    %46 = arith.maximumf %44, %45 : vector<16x128xf32>
    %c0_42 = arith.constant 0 : index
    %c0_43 = arith.constant 0 : index
    %47 = vector.load %arg4[%c0_42, %c0_43] : memref<8x128xf32, #tpu.memory_space<vmem>>, vector<8x128xf32>
    %cst_44 = arith.constant dense<0.000000e+00> : vector<8x16xf32>
    %48 = tpu.matmul %47, %46, %cst_44 {dimension_numbers = #tpu.dot_dimension_numbers<[1], [1], [0], [0], [0, 0, 1, 0], [], []>} : vector<8x128xf32>, vector<16x128xf32>, vector<8x16xf32> -> vector<8x16xf32>
    %c0_45 = arith.constant 0 : index
    %c0_46 = arith.constant 0 : index
    %49 = memref.load %arg6[%c0_45, %c0_46] : memref<1x1xf32, #tpu.memory_space<smem>>
    %50 = vector.broadcast %49 : f32 to vector<8x16xf32>
    %51 = arith.addf %48, %50 : vector<8x16xf32>
    %52 = arith.negf %51 : vector<8x16xf32>
    %53 = math.exp %52 : vector<8x16xf32>
    %cst_47 = arith.constant 1.000000e+00 : f32
    %54 = vector.broadcast %cst_47 : f32 to vector<8x16xf32>
    %55 = arith.addf %54, %53 : vector<8x16xf32>
    %56 = arith.divf %54, %55 : vector<8x16xf32>
    %57 = vector.shape_cast %56 : vector<8x16xf32> to vector<1x8x16xf32>
    %c0_48 = arith.constant 0 : index
    %c0_49 = arith.constant 0 : index
    %c0_50 = arith.constant 0 : index
    %58 = vector.load %arg7[%c0_48, %c0_49, %c0_50] : memref<1x8x16xf32, #tpu.memory_space<vmem>>, vector<1x8x16xf32>
    tpu.vector_store %arg7[%c0_48, %c0_49, %c0_50], %57 {strides = array<i32>} : memref<1x8x16xf32, #tpu.memory_space<vmem>>, vector<1x8x16xf32>,
    return
  }
  func.func @transform_0(%arg0: i32) -> (i32, i32, i32) {
    %c0_i32 = arith.constant 0 : i32
    %c0_i32_0 = arith.constant 0 : i32
    %c0_i32_1 = arith.constant 0 : i32
    return %c0_i32, %arg0, %c0_i32_0 : i32, i32, i32
  }
  func.func @transform_1(%arg0: i32) -> (i32, i32, i32) {
    %c0_i32 = arith.constant 0 : i32
    %c0_i32_0 = arith.constant 0 : i32
    %c0_i32_1 = arith.constant 0 : i32
    %c0_i32_2 = arith.constant 0 : i32
    return %c0_i32, %c0_i32_0, %c0_i32_1 : i32, i32, i32
  }
  func.func @transform_2(%arg0: i32) -> (i32, i32) {
    %c0_i32 = arith.constant 0 : i32
    %c0_i32_0 = arith.constant 0 : i32
    %c0_i32_1 = arith.constant 0 : i32
    return %c0_i32, %c0_i32_0 : i32, i32
  }
  func.func @transform_3(%arg0: i32) -> (i32, i32) {
    %c0_i32 = arith.constant 0 : i32
    %c0_i32_0 = arith.constant 0 : i32
    %c0_i32_1 = arith.constant 0 : i32
    return %c0_i32, %c0_i32_0 : i32, i32
  }
  func.func @transform_4(%arg0: i32) -> (i32, i32) {
    %c0_i32 = arith.constant 0 : i32
    %c0_i32_0 = arith.constant 0 : i32
    %c0_i32_1 = arith.constant 0 : i32
    return %c0_i32, %c0_i32_0 : i32, i32
  }
  func.func @transform_5(%arg0: i32) -> (i32, i32) {
    %c0_i32 = arith.constant 0 : i32
    %c0_i32_0 = arith.constant 0 : i32
    %c0_i32_1 = arith.constant 0 : i32
    return %c0_i32, %c0_i32_0 : i32, i32
  }
  func.func @transform_6(%arg0: i32) -> (i32, i32, i32) {
    %c0_i32 = arith.constant 0 : i32
    %c0_i32_0 = arith.constant 0 : i32
    %c0_i32_1 = arith.constant 0 : i32
    return %arg0, %c0_i32, %c0_i32_0 : i32, i32, i32
  }
}

</mosaic_0001>

<llo_original>
// kernel: cnn_forward.1
$region0: #{cnn_forward.1}
  #allocation0 [shape = 'u32[]', space=smem, size = 0x4, offset = 0x4, fixed_abs, tag = 'smem constant byte address 0x4 - core index']
  #allocation1 [shape = 'u32[144,128]{1,0:T(1,128)}', space=vmem, size = 0x12000, scoped, tag = 'internal scratch']
  #allocation2 [shape = 'f32[1,1]{1,0:T(1,128)S(6)}', space=smem, size = 0x200, scoped, tag = 'scoped memory for cnn_forward.1']
  %s0 = inlined_call_operand.vmem [shape: bf16[8,16,128], index: 0, kind: input, shape index: {}]
  %s1 = inlined_call_operand.vmem [shape: bf16[4,128,128], index: 1, kind: input, shape index: {}]
  %s2 = inlined_call_operand.vmem [shape: f32[1,128], index: 2, kind: input, shape index: {}]
  %s3 = inlined_call_operand.vmem [shape: f32[8,128], index: 3, kind: input, shape index: {}]
  %s4 = inlined_call_operand.vmem [shape: f32[1,128], index: 4, kind: input, shape index: {}]
  %s5 = inlined_call_operand.<no memory space> [shape: f32[1,1], index: 5, kind: input, shape index: {}]
  %s6 = inlined_call_operand.vmem [shape: f32[1,8,16], index: 6, kind: output, shape index: {}]
  %s7 = sld [smem:[#allocation0]]
  $region34: #{cnn_forward.1} parent=0
    _
  %s9 = ssub.s32 1, %s7
  %s10 = scalar_select 0, %s9, %s7
  %11 = sst [smem:[#allocation2]] %s5
  // Predicated region
  $region2: #{cnn_forward.1} parent=0 // pred_check
    _
  $region3: #{cnn_forward.1} parent=0 // pred_check_branch
    %13 = sbr.rel (0) target = $region5
  $region4: #{cnn_forward.1} parent=0 // pred_region
    _
  $region5: #{cnn_forward.1} parent=0 // pred_fallthru
    _
  // Predicated region
  $region6: #{cnn_forward.1} parent=0 // pred_check
    _
  $region7: #{cnn_forward.1} parent=0 // pred_check_branch
    %15 = sbr.rel (0) target = $region9
  $region8: #{cnn_forward.1} parent=0 // pred_region
    _
  $region9: #{cnn_forward.1} parent=0 // pred_fallthru
    _
  // Predicated region
  $region10: #{cnn_forward.1} parent=0 // pred_check
    _
  $region11: #{cnn_forward.1} parent=0 // pred_check_branch
    %17 = sbr.rel (0) target = $region13
  $region12: #{cnn_forward.1} parent=0 // pred_region
    _
  $region13: #{cnn_forward.1} parent=0 // pred_fallthru
    _
  // Predicated region
  $region14: #{cnn_forward.1} parent=0 // pred_check
    _
  $region15: #{cnn_forward.1} parent=0 // pred_check_branch
    %19 = sbr.rel (0) target = $region17
  $region16: #{cnn_forward.1} parent=0 // pred_region
    _
  $region17: #{cnn_forward.1} parent=0 // pred_fallthru
    _
  // Predicated region
  $region18: #{cnn_forward.1} parent=0 // pred_check
    _
  $region19: #{cnn_forward.1} parent=0 // pred_check_branch
    %21 = sbr.rel (0) target = $region21
  $region20: #{cnn_forward.1} parent=0 // pred_region
    _
  $region21: #{cnn_forward.1} parent=0 // pred_fallthru
    _
  // Predicated region
  $region22: #{cnn_forward.1} parent=0 // pred_check
    _
  $region23: #{cnn_forward.1} parent=0 // pred_check_branch
    %23 = sbr.rel (0) target = $region25
  $region24: #{cnn_forward.1} parent=0 // pred_region
    _
  $region25: #{cnn_forward.1} parent=0 // pred_fallthru
    _
  %v25 = vld [vmem:[%s0] sm:$0xf]
  %v26 = vld [vmem:[%s0 + $0x4] sm:$0xf]
  %v27 = vld [vmem:[%s0 + $0x8] sm:$0xf]
  %v28 = vld [vmem:[%s0 + $0xc] sm:$0xf]
  %v29 = vld [vmem:[%s0 + $0x10] sm:$0xf]
  %v30 = vld [vmem:[%s0 + $0x14] sm:$0xf]
  %v31 = vld [vmem:[%s0 + $0x18] sm:$0xf]
  %v32 = vld [vmem:[%s0 + $0x1c] sm:$0xf]
  %v33 = vld [vmem:[%s0 + $0x20] sm:$0xf]
  %v34 = vld [vmem:[%s0 + $0x24] sm:$0xf]
  %v35 = vld [vmem:[%s1] sm:$0xf]
  %v36 = vld [vmem:[%s1 + $0x4] sm:$0xf]
  %v37 = vld [vmem:[%s1 + $0x8] sm:$0xf]
  %v38 = vld [vmem:[%s1 + $0xc] sm:$0xf]
  %v39 = vld [vmem:[%s1 + $0x10] sm:$0xf]
  %v40 = vld [vmem:[%s1 + $0x14] sm:$0xf]
  %v41 = vld [vmem:[%s1 + $0x18] sm:$0xf]
  %v42 = vld [vmem:[%s1 + $0x1c] sm:$0xf]
  %v43 = vld [vmem:[%s1 + $0x20] sm:$0xf]
  %v44 = vld [vmem:[%s1 + $0x24] sm:$0xf]
  %v45 = vld [vmem:[%s1 + $0x28] sm:$0xf]
  %v46 = vld [vmem:[%s1 + $0x2c] sm:$0xf]
  %v47 = vld [vmem:[%s1 + $0x30] sm:$0xf]
  %v48 = vld [vmem:[%s1 + $0x34] sm:$0xf]
  %v49 = vld [vmem:[%s1 + $0x38] sm:$0xf]
  %v50 = vld [vmem:[%s1 + $0x3c] sm:$0xf]
  %s51 = scalar_lea.vmem %s0, 8
  %v52 = vld [vmem:[%s51] sm:$0xf]
  %v53 = vld [vmem:[%s51 + $0x4] sm:$0xf]
  %v54 = vld [vmem:[%s51 + $0x8] sm:$0xf]
  %v55 = vld [vmem:[%s51 + $0xc] sm:$0xf]
  %v56 = vld [vmem:[%s51 + $0x10] sm:$0xf]
  %v57 = vld [vmem:[%s51 + $0x14] sm:$0xf]
  %v58 = vld [vmem:[%s51 + $0x18] sm:$0xf]
  %v59 = vld [vmem:[%s51 + $0x1c] sm:$0xf]
  %v60 = vld [vmem:[%s51 + $0x20] sm:$0xf]
  %v61 = vld [vmem:[%s51 + $0x24] sm:$0xf]
  %s62 = scalar_lea.vmem %s1, 64
  %v63 = vld [vmem:[%s62] sm:$0xf]
  %v64 = vld [vmem:[%s62 + $0x4] sm:$0xf]
  %v65 = vld [vmem:[%s62 + $0x8] sm:$0xf]
  %v66 = vld [vmem:[%s62 + $0xc] sm:$0xf]
  %v67 = vld [vmem:[%s62 + $0x10] sm:$0xf]
  %v68 = vld [vmem:[%s62 + $0x14] sm:$0xf]
  %v69 = vld [vmem:[%s62 + $0x18] sm:$0xf]
  %v70 = vld [vmem:[%s62 + $0x1c] sm:$0xf]
  %v71 = vld [vmem:[%s62 + $0x20] sm:$0xf]
  %v72 = vld [vmem:[%s62 + $0x24] sm:$0xf]
  %v73 = vld [vmem:[%s62 + $0x28] sm:$0xf]
  %v74 = vld [vmem:[%s62 + $0x2c] sm:$0xf]
  %v75 = vld [vmem:[%s62 + $0x30] sm:$0xf]
  %v76 = vld [vmem:[%s62 + $0x34] sm:$0xf]
  %v77 = vld [vmem:[%s62 + $0x38] sm:$0xf]
  %v78 = vld [vmem:[%s62 + $0x3c] sm:$0xf]
  %v89 = vunpack.c.l.b16 %v52
  %v90 = vunpack.c.l.b16 %v53
  %v91 = vunpack.c.l.b16 %v54
  %v92 = vunpack.c.l.b16 %v55
  %v93 = vunpack.c.l.b16 %v56
  %v94 = vunpack.c.l.b16 %v57
  %v95 = vunpack.c.l.b16 %v58
  %v96 = vunpack.c.l.b16 %v59
  %v97 = vunpack.c.l.b16 %v60
  %v98 = vunpack.c.l.b16 %v61
  %v99 = vpack.c.b16 %v90, %v89
  %v100 = vpack.c.b16 %v92, %v91
  %v101 = vpack.c.b16 %v94, %v93
  %v102 = vpack.c.b16 %v96, %v95
  %v103 = vpack.c.b16 %v98, %v97
  %v125 = vunpack.c.l.b16 %v63
  %v126 = vunpack.c.l.b16 %v64
  %v127 = vunpack.c.l.b16 %v65
  %v128 = vunpack.c.l.b16 %v66
  %v129 = vunpack.c.l.b16 %v67
  %v130 = vunpack.c.l.b16 %v68
  %v131 = vunpack.c.l.b16 %v69
  %v132 = vunpack.c.l.b16 %v70
  %v133 = vunpack.c.l.b16 %v71
  %v134 = vunpack.c.l.b16 %v72
  %v135 = vunpack.c.l.b16 %v73
  %v136 = vunpack.c.l.b16 %v74
  %v137 = vunpack.c.l.b16 %v75
  %v138 = vunpack.c.l.b16 %v76
  %v139 = vunpack.c.l.b16 %v77
  %v140 = vunpack.c.l.b16 %v78
  %v141 = vpack.c.b16 %v126, %v125
  %v142 = vpack.c.b16 %v128, %v127
  %v143 = vpack.c.b16 %v130, %v129
  %v144 = vpack.c.b16 %v132, %v131
  %v145 = vpack.c.b16 %v134, %v133
  %v146 = vpack.c.b16 %v136, %v135
  %v147 = vpack.c.b16 %v138, %v137
  %v148 = vpack.c.b16 %v140, %v139
  %157 = vmatprep.subr.bf16.mxu0 0
  %158 = vmatpush1.bf16.msra.mxu0 %v141
  %159 = vmatprep.subr.bf16.mxu0 0
  %160 = vmatpush1.bf16.msra.mxu0 %v142
  %161 = vmatprep.subr.bf16.mxu0 0
  %162 = vmatpush1.bf16.msra.mxu0 %v143
  %163 = vmatprep.subr.bf16.mxu0 0
  %164 = vmatpush1.bf16.msra.mxu0 %v144
  %165 = vmatprep.subr.bf16.mxu0 0
  %166 = vmatpush1.bf16.msra.mxu0 %v145
  %167 = vmatprep.subr.bf16.mxu0 0
  %168 = vmatpush1.bf16.msra.mxu0 %v146
  %169 = vmatprep.subr.bf16.mxu0 0
  %170 = vmatpush1.bf16.msra.mxu0 %v147
  %171 = vmatprep.subr.bf16.mxu0 0
  %172 = vmatpush1.bf16.msra.mxu0 %v148
  %173 = vmatprep.subr.bf16.mxu0 0
  %174 = vmatpush1.bf16.msra.mxu0 0
  %175 = vmatprep.subr.bf16.mxu0 0
  %176 = vmatpush1.bf16.msra.mxu0 0
  %177 = vmatprep.subr.bf16.mxu0 0
  %178 = vmatpush1.bf16.msra.mxu0 0
  %179 = vmatprep.subr.bf16.mxu0 0
  %180 = vmatpush1.bf16.msra.mxu0 0
  %181 = vmatprep.subr.bf16.mxu0 0
  %182 = vmatpush1.bf16.msra.mxu0 0
  %183 = vmatprep.subr.bf16.mxu0 0
  %184 = vmatpush1.bf16.msra.mxu0 0
  %185 = vmatprep.subr.bf16.mxu0 0
  %186 = vmatpush1.bf16.msra.mxu0 0
  %187 = vmatprep.subr.bf16.mxu0 0
  %188 = vmatpush1.bf16.msra.mxu0 0
  %189 = vmatprep.mubr.bf16.mxu0 0
  %190 = vmatmul.mubr.bf16.gmra.mrb[0].mxu0 %v99
  %v191 = vpop.f32.mrb[0].mxu0
  %v192 = vadd.f32 0.0, %v191
  %v193 = vpop.f32.mrb[0].mxu0
  %v194 = vpop.f32.mrb[0].mxu0
  %v195 = vadd.f32 0.0, %v194
  %v196 = vpop.f32.mrb[0].mxu0
  %197 = vmatprep.mubr.bf16.mxu0 0
  %198 = vmatmul.mubr.bf16.gmra.mrb[0].mxu0 %v100
  %v199 = vpop.f32.mrb[0].mxu0
  %v200 = vadd.f32 0.0, %v199
  %v201 = vpop.f32.mrb[0].mxu0
  %v202 = vpop.f32.mrb[0].mxu0
  %v203 = vadd.f32 0.0, %v202
  %v204 = vpop.f32.mrb[0].mxu0
  %205 = vmatprep.mubr.bf16.mxu0 0
  %206 = vmatmul.mubr.bf16.gmra.mrb[0].mxu0 %v101
  %v207 = vpop.f32.mrb[0].mxu0
  %v208 = vadd.f32 0.0, %v207
  %v209 = vpop.f32.mrb[0].mxu0
  %v210 = vpop.f32.mrb[0].mxu0
  %v211 = vadd.f32 0.0, %v210
  %v212 = vpop.f32.mrb[0].mxu0
  %213 = vmatprep.mubr.bf16.mxu0 0
  %214 = vmatmul.mubr.bf16.gmra.mrb[0].mxu0 %v102
  %v215 = vpop.f32.mrb[0].mxu0
  %v216 = vadd.f32 0.0, %v215
  %v217 = vpop.f32.mrb[0].mxu0
  %v218 = vpop.f32.mrb[0].mxu0
  %v219 = vadd.f32 0.0, %v218
  %v220 = vpop.f32.mrb[0].mxu0
  %221 = vmatprep.mubr.bf16.mxu0 0
  %222 = vmatmul.mubr.bf16.gmra.mrb[0].mxu0 %v103
  %v223 = vpop.f32.mrb[0].mxu0
  %v224 = vadd.f32 0.0, %v223
  %v225 = vpop.f32.mrb[0].mxu0
  %v226 = vpop.f32.mrb[0].mxu0
  %v227 = vadd.f32 0.0, %v226
  %v228 = vpop.f32.mrb[0].mxu0
  %229 = vdwg.mxu0
  %v240 = vunpack.c.l.b16 %v25
  %v241 = vunpack.c.l.b16 %v26
  %v242 = vunpack.c.l.b16 %v27
  %v243 = vunpack.c.l.b16 %v28
  %v244 = vunpack.c.l.b16 %v29
  %v245 = vunpack.c.l.b16 %v30
  %v246 = vunpack.c.l.b16 %v31
  %v247 = vunpack.c.l.b16 %v32
  %v248 = vunpack.c.l.b16 %v33
  %v249 = vunpack.c.l.b16 %v34
  %v250 = vpack.c.b16 %v241, %v240
  %v251 = vpack.c.b16 %v243, %v242
  %v252 = vpack.c.b16 %v245, %v244
  %v253 = vpack.c.b16 %v247, %v246
  %v254 = vpack.c.b16 %v249, %v248
  %v276 = vunpack.c.l.b16 %v35
  %v277 = vunpack.c.l.b16 %v36
  %v278 = vunpack.c.l.b16 %v37
  %v279 = vunpack.c.l.b16 %v38
  %v280 = vunpack.c.l.b16 %v39
  %v281 = vunpack.c.l.b16 %v40
  %v282 = vunpack.c.l.b16 %v41
  %v283 = vunpack.c.l.b16 %v42
  %v284 = vunpack.c.l.b16 %v43
  %v285 = vunpack.c.l.b16 %v44
  %v286 = vunpack.c.l.b16 %v45
  %v287 = vunpack.c.l.b16 %v46
  %v288 = vunpack.c.l.b16 %v47
  %v289 = vunpack.c.l.b16 %v48
  %v290 = vunpack.c.l.b16 %v49
  %v291 = vunpack.c.l.b16 %v50
  %v292 = vpack.c.b16 %v277, %v276
  %v293 = vpack.c.b16 %v279, %v278
  %v294 = vpack.c.b16 %v281, %v280
  %v295 = vpack.c.b16 %v283, %v282
  %v296 = vpack.c.b16 %v285, %v284
  %v297 = vpack.c.b16 %v287, %v286
  %v298 = vpack.c.b16 %v289, %v288
  %v299 = vpack.c.b16 %v291, %v290
  %308 = vmatprep.subr.bf16.mxu0 0
  %309 = vmatpush1.bf16.msra.mxu0 %v292
  %310 = vmatprep.subr.bf16.mxu0 0
  %311 = vmatpush1.bf16.msra.mxu0 %v293
  %312 = vmatprep.subr.bf16.mxu0 0
  %313 = vmatpush1.bf16.msra.mxu0 %v294
  %314 = vmatprep.subr.bf16.mxu0 0
  %315 = vmatpush1.bf16.msra.mxu0 %v295
  %316 = vmatprep.subr.bf16.mxu0 0
  %317 = vmatpush1.bf16.msra.mxu0 %v296
  %318 = vmatprep.subr.bf16.mxu0 0
  %319 = vmatpush1.bf16.msra.mxu0 %v297
  %320 = vmatprep.subr.bf16.mxu0 0
  %321 = vmatpush1.bf16.msra.mxu0 %v298
  %322 = vmatprep.subr.bf16.mxu0 0
  %323 = vmatpush1.bf16.msra.mxu0 %v299
  %324 = vmatprep.subr.bf16.mxu0 0
  %325 = vmatpush1.bf16.msra.mxu0 0
  %326 = vmatprep.subr.bf16.mxu0 0
  %327 = vmatpush1.bf16.msra.mxu0 0
  %328 = vmatprep.subr.bf16.mxu0 0
  %329 = vmatpush1.bf16.msra.mxu0 0
  %330 = vmatprep.subr.bf16.mxu0 0
  %331 = vmatpush1.bf16.msra.mxu0 0
  %332 = vmatprep.subr.bf16.mxu0 0
  %333 = vmatpush1.bf16.msra.mxu0 0
  %334 = vmatprep.subr.bf16.mxu0 0
  %335 = vmatpush1.bf16.msra.mxu0 0
  %336 = vmatprep.subr.bf16.mxu0 0
  %337 = vmatpush1.bf16.msra.mxu0 0
  %338 = vmatprep.subr.bf16.mxu0 0
  %339 = vmatpush1.bf16.msra.mxu0 0
  %340 = vmatprep.mubr.bf16.mxu0 0
  %341 = vmatmul.mubr.bf16.gmra.mrb[0].mxu0 %v250
  %v342 = vpop.f32.mrb[0].mxu0
  %v343 = vadd.f32 %v192, %v342
  %v344 = vpop.f32.mrb[0].mxu0
  %v345 = vpop.f32.mrb[0].mxu0
  %v346 = vadd.f32 %v195, %v345
  %v347 = vpop.f32.mrb[0].mxu0
  %348 = vmatprep.mubr.bf16.mxu0 0
  %349 = vmatmul.mubr.bf16.gmra.mrb[0].mxu0 %v251
  %v350 = vpop.f32.mrb[0].mxu0
  %v351 = vadd.f32 %v200, %v350
  %v352 = vpop.f32.mrb[0].mxu0
  %v353 = vpop.f32.mrb[0].mxu0
  %v354 = vadd.f32 %v203, %v353
  %v355 = vpop.f32.mrb[0].mxu0
  %356 = vmatprep.mubr.bf16.mxu0 0
  %357 = vmatmul.mubr.bf16.gmra.mrb[0].mxu0 %v252
  %v358 = vpop.f32.mrb[0].mxu0
  %v359 = vadd.f32 %v208, %v358
  %v360 = vpop.f32.mrb[0].mxu0
  %v361 = vpop.f32.mrb[0].mxu0
  %v362 = vadd.f32 %v211, %v361
  %v363 = vpop.f32.mrb[0].mxu0
  %364 = vmatprep.mubr.bf16.mxu0 0
  %365 = vmatmul.mubr.bf16.gmra.mrb[0].mxu0 %v253
  %v366 = vpop.f32.mrb[0].mxu0
  %v367 = vadd.f32 %v216, %v366
  %v368 = vpop.f32.mrb[0].mxu0
  %v369 = vpop.f32.mrb[0].mxu0
  %v370 = vadd.f32 %v219, %v369
  %v371 = vpop.f32.mrb[0].mxu0
  %372 = vmatprep.mubr.bf16.mxu0 0
  %373 = vmatmul.mubr.bf16.gmra.mrb[0].mxu0 %v254
  %v374 = vpop.f32.mrb[0].mxu0
  %v375 = vadd.f32 %v224, %v374
  %v376 = vpop.f32.mrb[0].mxu0
  %v377 = vpop.f32.mrb[0].mxu0
  %v378 = vadd.f32 %v227, %v377
  %v379 = vpop.f32.mrb[0].mxu0
  %380 = vdwg.mxu0
  %s381 = scalar_lea.vmem %s0, 16
  %v382 = vld [vmem:[%s381] sm:$0xf]
  %v383 = vld [vmem:[%s381 + $0x4] sm:$0xf]
  %v384 = vld [vmem:[%s381 + $0x8] sm:$0xf]
  %v385 = vld [vmem:[%s381 + $0xc] sm:$0xf]
  %v386 = vld [vmem:[%s381 + $0x10] sm:$0xf]
  %v387 = vld [vmem:[%s381 + $0x14] sm:$0xf]
  %v388 = vld [vmem:[%s381 + $0x18] sm:$0xf]
  %v389 = vld [vmem:[%s381 + $0x1c] sm:$0xf]
  %v390 = vld [vmem:[%s381 + $0x20] sm:$0xf]
  %v391 = vld [vmem:[%s381 + $0x24] sm:$0xf]
  %s392 = scalar_lea.vmem %s1, 128
  %v393 = vld [vmem:[%s392] sm:$0xf]
  %v394 = vld [vmem:[%s392 + $0x4] sm:$0xf]
  %v395 = vld [vmem:[%s392 + $0x8] sm:$0xf]
  %v396 = vld [vmem:[%s392 + $0xc] sm:$0xf]
  %v397 = vld [vmem:[%s392 + $0x10] sm:$0xf]
  %v398 = vld [vmem:[%s392 + $0x14] sm:$0xf]
  %v399 = vld [vmem:[%s392 + $0x18] sm:$0xf]
  %v400 = vld [vmem:[%s392 + $0x1c] sm:$0xf]
  %v401 = vld [vmem:[%s392 + $0x20] sm:$0xf]
  %v402 = vld [vmem:[%s392 + $0x24] sm:$0xf]
  %v403 = vld [vmem:[%s392 + $0x28] sm:$0xf]
  %v404 = vld [vmem:[%s392 + $0x2c] sm:$0xf]
  %v405 = vld [vmem:[%s392 + $0x30] sm:$0xf]
  %v406 = vld [vmem:[%s392 + $0x34] sm:$0xf]
  %v407 = vld [vmem:[%s392 + $0x38] sm:$0xf]
  %v408 = vld [vmem:[%s392 + $0x3c] sm:$0xf]
  %v419 = vunpack.c.l.b16 %v382
  %v420 = vunpack.c.l.b16 %v383
  %v421 = vunpack.c.l.b16 %v384
  %v422 = vunpack.c.l.b16 %v385
  %v423 = vunpack.c.l.b16 %v386
  %v424 = vunpack.c.l.b16 %v387
  %v425 = vunpack.c.l.b16 %v388
  %v426 = vunpack.c.l.b16 %v389
  %v427 = vunpack.c.l.b16 %v390
  %v428 = vunpack.c.l.b16 %v391
  %v429 = vpack.c.b16 %v420, %v419
  %v430 = vpack.c.b16 %v422, %v421
  %v431 = vpack.c.b16 %v424, %v423
  %v432 = vpack.c.b16 %v426, %v425
  %v433 = vpack.c.b16 %v428, %v427
  %v455 = vunpack.c.l.b16 %v393
  %v456 = vunpack.c.l.b16 %v394
  %v457 = vunpack.c.l.b16 %v395
  %v458 = vunpack.c.l.b16 %v396
  %v459 = vunpack.c.l.b16 %v397
  %v460 = vunpack.c.l.b16 %v398
  %v461 = vunpack.c.l.b16 %v399
  %v462 = vunpack.c.l.b16 %v400
  %v463 = vunpack.c.l.b16 %v401
  %v464 = vunpack.c.l.b16 %v402
  %v465 = vunpack.c.l.b16 %v403
  %v466 = vunpack.c.l.b16 %v404
  %v467 = vunpack.c.l.b16 %v405
  %v468 = vunpack.c.l.b16 %v406
  %v469 = vunpack.c.l.b16 %v407
  %v470 = vunpack.c.l.b16 %v408
  %v471 = vpack.c.b16 %v456, %v455
  %v472 = vpack.c.b16 %v458, %v457
  %v473 = vpack.c.b16 %v460, %v459
  %v474 = vpack.c.b16 %v462, %v461
  %v475 = vpack.c.b16 %v464, %v463
  %v476 = vpack.c.b16 %v466, %v465
  %v477 = vpack.c.b16 %v468, %v467
  %v478 = vpack.c.b16 %v470, %v469
  %487 = vmatprep.subr.bf16.mxu0 0
  %488 = vmatpush1.bf16.msra.mxu0 %v471
  %489 = vmatprep.subr.bf16.mxu0 0
  %490 = vmatpush1.bf16.msra.mxu0 %v472
  %491 = vmatprep.subr.bf16.mxu0 0
  %492 = vmatpush1.bf16.msra.mxu0 %v473
  %493 = vmatprep.subr.bf16.mxu0 0
  %494 = vmatpush1.bf16.msra.mxu0 %v474
  %495 = vmatprep.subr.bf16.mxu0 0
  %496 = vmatpush1.bf16.msra.mxu0 %v475
  %497 = vmatprep.subr.bf16.mxu0 0
  %498 = vmatpush1.bf16.msra.mxu0 %v476
  %499 = vmatprep.subr.bf16.mxu0 0
  %500 = vmatpush1.bf16.msra.mxu0 %v477
  %501 = vmatprep.subr.bf16.mxu0 0
  %502 = vmatpush1.bf16.msra.mxu0 %v478
  %503 = vmatprep.subr.bf16.mxu0 0
  %504 = vmatpush1.bf16.msra.mxu0 0
  %505 = vmatprep.subr.bf16.mxu0 0
  %506 = vmatpush1.bf16.msra.mxu0 0
  %507 = vmatprep.subr.bf16.mxu0 0
  %508 = vmatpush1.bf16.msra.mxu0 0
  %509 = vmatprep.subr.bf16.mxu0 0
  %510 = vmatpush1.bf16.msra.mxu0 0
  %511 = vmatprep.subr.bf16.mxu0 0
  %512 = vmatpush1.bf16.msra.mxu0 0
  %513 = vmatprep.subr.bf16.mxu0 0
  %514 = vmatpush1.bf16.msra.mxu0 0
  %515 = vmatprep.subr.bf16.mxu0 0
  %516 = vmatpush1.bf16.msra.mxu0 0
  %517 = vmatprep.subr.bf16.mxu0 0
  %518 = vmatpush1.bf16.msra.mxu0 0
  %519 = vmatprep.mubr.bf16.mxu0 0
  %520 = vmatmul.mubr.bf16.gmra.mrb[0].mxu0 %v429
  %v521 = vpop.f32.mrb[0].mxu0
  %v522 = vadd.f32 0.0, %v521
  %v523 = vpop.f32.mrb[0].mxu0
  %v524 = vpop.f32.mrb[0].mxu0
  %v525 = vadd.f32 0.0, %v524
  %v526 = vpop.f32.mrb[0].mxu0
  %527 = vmatprep.mubr.bf16.mxu0 0
  %528 = vmatmul.mubr.bf16.gmra.mrb[0].mxu0 %v430
  %v529 = vpop.f32.mrb[0].mxu0
  %v530 = vadd.f32 0.0, %v529
  %v531 = vpop.f32.mrb[0].mxu0
  %v532 = vpop.f32.mrb[0].mxu0
  %v533 = vadd.f32 0.0, %v532
  %v534 = vpop.f32.mrb[0].mxu0
  %535 = vmatprep.mubr.bf16.mxu0 0
  %536 = vmatmul.mubr.bf16.gmra.mrb[0].mxu0 %v431
  %v537 = vpop.f32.mrb[0].mxu0
  %v538 = vadd.f32 0.0, %v537
  %v539 = vpop.f32.mrb[0].mxu0
  %v540 = vpop.f32.mrb[0].mxu0
  %v541 = vadd.f32 0.0, %v540
  %v542 = vpop.f32.mrb[0].mxu0
  %543 = vmatprep.mubr.bf16.mxu0 0
  %544 = vmatmul.mubr.bf16.gmra.mrb[0].mxu0 %v432
  %v545 = vpop.f32.mrb[0].mxu0
  %v546 = vadd.f32 0.0, %v545
  %v547 = vpop.f32.mrb[0].mxu0
  %v548 = vpop.f32.mrb[0].mxu0
  %v549 = vadd.f32 0.0, %v548
  %v550 = vpop.f32.mrb[0].mxu0
  %551 = vmatprep.mubr.bf16.mxu0 0
  %552 = vmatmul.mubr.bf16.gmra.mrb[0].mxu0 %v433
  %v553 = vpop.f32.mrb[0].mxu0
  %v554 = vadd.f32 0.0, %v553
  %v555 = vpop.f32.mrb[0].mxu0
  %v556 = vpop.f32.mrb[0].mxu0
  %v557 = vadd.f32 0.0, %v556
  %v558 = vpop.f32.mrb[0].mxu0
  %559 = vdwg.mxu0
  %v560 = vadd.f32 %v343, %v522
  %v561 = vadd.f32 %v346, %v525
  %v562 = vadd.f32 %v351, %v530
  %v563 = vadd.f32 %v354, %v533
  %v564 = vadd.f32 %v359, %v538
  %v565 = vadd.f32 %v362, %v541
  %v566 = vadd.f32 %v367, %v546
  %v567 = vadd.f32 %v370, %v549
  %v568 = vadd.f32 %v375, %v554
  %v569 = vadd.f32 %v378, %v557
  %s570 = scalar_lea.vmem %s0, 24
  %v571 = vld [vmem:[%s570] sm:$0xf]
  %v572 = vld [vmem:[%s570 + $0x4] sm:$0xf]
  %v573 = vld [vmem:[%s570 + $0x8] sm:$0xf]
  %v574 = vld [vmem:[%s570 + $0xc] sm:$0xf]
  %v575 = vld [vmem:[%s570 + $0x10] sm:$0xf]
  %v576 = vld [vmem:[%s570 + $0x14] sm:$0xf]
  %v577 = vld [vmem:[%s570 + $0x18] sm:$0xf]
  %v578 = vld [vmem:[%s570 + $0x1c] sm:$0xf]
  %v579 = vld [vmem:[%s570 + $0x20] sm:$0xf]
  %v580 = vld [vmem:[%s570 + $0x24] sm:$0xf]
  %s581 = scalar_lea.vmem %s1, 192
  %v582 = vld [vmem:[%s581] sm:$0xf]
  %v583 = vld [vmem:[%s581 + $0x4] sm:$0xf]
  %v584 = vld [vmem:[%s581 + $0x8] sm:$0xf]
  %v585 = vld [vmem:[%s581 + $0xc] sm:$0xf]
  %v586 = vld [vmem:[%s581 + $0x10] sm:$0xf]
  %v587 = vld [vmem:[%s581 + $0x14] sm:$0xf]
  %v588 = vld [vmem:[%s581 + $0x18] sm:$0xf]
  %v589 = vld [vmem:[%s581 + $0x1c] sm:$0xf]
  %v590 = vld [vmem:[%s581 + $0x20] sm:$0xf]
  %v591 = vld [vmem:[%s581 + $0x24] sm:$0xf]
  %v592 = vld [vmem:[%s581 + $0x28] sm:$0xf]
  %v593 = vld [vmem:[%s581 + $0x2c] sm:$0xf]
  %v594 = vld [vmem:[%s581 + $0x30] sm:$0xf]
  %v595 = vld [vmem:[%s581 + $0x34] sm:$0xf]
  %v596 = vld [vmem:[%s581 + $0x38] sm:$0xf]
  %v597 = vld [vmem:[%s581 + $0x3c] sm:$0xf]
  %v608 = vunpack.c.l.b16 %v571
  %v609 = vunpack.c.l.b16 %v572
  %v610 = vunpack.c.l.b16 %v573
  %v611 = vunpack.c.l.b16 %v574
  %v612 = vunpack.c.l.b16 %v575
  %v613 = vunpack.c.l.b16 %v576
  %v614 = vunpack.c.l.b16 %v577
  %v615 = vunpack.c.l.b16 %v578
  %v616 = vunpack.c.l.b16 %v579
  %v617 = vunpack.c.l.b16 %v580
  %v618 = vpack.c.b16 %v609, %v608
  %v619 = vpack.c.b16 %v611, %v610
  %v620 = vpack.c.b16 %v613, %v612
  %v621 = vpack.c.b16 %v615, %v614
  %v622 = vpack.c.b16 %v617, %v616
  %v644 = vunpack.c.l.b16 %v582
  %v645 = vunpack.c.l.b16 %v583
  %v646 = vunpack.c.l.b16 %v584
  %v647 = vunpack.c.l.b16 %v585
  %v648 = vunpack.c.l.b16 %v586
  %v649 = vunpack.c.l.b16 %v587
  %v650 = vunpack.c.l.b16 %v588
  %v651 = vunpack.c.l.b16 %v589
  %v652 = vunpack.c.l.b16 %v590
  %v653 = vunpack.c.l.b16 %v591
  %v654 = vunpack.c.l.b16 %v592
  %v655 = vunpack.c.l.b16 %v593
  %v656 = vunpack.c.l.b16 %v594
  %v657 = vunpack.c.l.b16 %v595
  %v658 = vunpack.c.l.b16 %v596
  %v659 = vunpack.c.l.b16 %v597
  %v660 = vpack.c.b16 %v645, %v644
  %v661 = vpack.c.b16 %v647, %v646
  %v662 = vpack.c.b16 %v649, %v648
  %v663 = vpack.c.b16 %v651, %v650
  %v664 = vpack.c.b16 %v653, %v652
  %v665 = vpack.c.b16 %v655, %v654
  %v666 = vpack.c.b16 %v657, %v656
  %v667 = vpack.c.b16 %v659, %v658
  %676 = vmatprep.subr.bf16.mxu0 0
  %677 = vmatpush1.bf16.msra.mxu0 %v660
  %678 = vmatprep.subr.bf16.mxu0 0
  %679 = vmatpush1.bf16.msra.mxu0 %v661
  %680 = vmatprep.subr.bf16.mxu0 0
  %681 = vmatpush1.bf16.msra.mxu0 %v662
  %682 = vmatprep.subr.bf16.mxu0 0
  %683 = vmatpush1.bf16.msra.mxu0 %v663
  %684 = vmatprep.subr.bf16.mxu0 0
  %685 = vmatpush1.bf16.msra.mxu0 %v664
  %686 = vmatprep.subr.bf16.mxu0 0
  %687 = vmatpush1.bf16.msra.mxu0 %v665
  %688 = vmatprep.subr.bf16.mxu0 0
  %689 = vmatpush1.bf16.msra.mxu0 %v666
  %690 = vmatprep.subr.bf16.mxu0 0
  %691 = vmatpush1.bf16.msra.mxu0 %v667
  %692 = vmatprep.subr.bf16.mxu0 0
  %693 = vmatpush1.bf16.msra.mxu0 0
  %694 = vmatprep.subr.bf16.mxu0 0
  %695 = vmatpush1.bf16.msra.mxu0 0
  %696 = vmatprep.subr.bf16.mxu0 0
  %697 = vmatpush1.bf16.msra.mxu0 0
  %698 = vmatprep.subr.bf16.mxu0 0
  %699 = vmatpush1.bf16.msra.mxu0 0
  %700 = vmatprep.subr.bf16.mxu0 0
  %701 = vmatpush1.bf16.msra.mxu0 0
  %702 = vmatprep.subr.bf16.mxu0 0
  %703 = vmatpush1.bf16.msra.mxu0 0
  %704 = vmatprep.subr.bf16.mxu0 0
  %705 = vmatpush1.bf16.msra.mxu0 0
  %706 = vmatprep.subr.bf16.mxu0 0
  %707 = vmatpush1.bf16.msra.mxu0 0
  %708 = vmatprep.mubr.bf16.mxu0 0
  %709 = vmatmul.mubr.bf16.gmra.mrb[0].mxu0 %v618
  %v710 = vpop.f32.mrb[0].mxu0
  %v711 = vadd.f32 0.0, %v710
  %v712 = vpop.f32.mrb[0].mxu0
  %v713 = vpop.f32.mrb[0].mxu0
  %v714 = vadd.f32 0.0, %v713
  %v715 = vpop.f32.mrb[0].mxu0
  %716 = vmatprep.mubr.bf16.mxu0 0
  %717 = vmatmul.mubr.bf16.gmra.mrb[0].mxu0 %v619
  %v718 = vpop.f32.mrb[0].mxu0
  %v719 = vadd.f32 0.0, %v718
  %v720 = vpop.f32.mrb[0].mxu0
  %v721 = vpop.f32.mrb[0].mxu0
  %v722 = vadd.f32 0.0, %v721
  %v723 = vpop.f32.mrb[0].mxu0
  %724 = vmatprep.mubr.bf16.mxu0 0
  %725 = vmatmul.mubr.bf16.gmra.mrb[0].mxu0 %v620
  %v726 = vpop.f32.mrb[0].mxu0
  %v727 = vadd.f32 0.0, %v726
  %v728 = vpop.f32.mrb[0].mxu0
  %v729 = vpop.f32.mrb[0].mxu0
  %v730 = vadd.f32 0.0, %v729
  %v731 = vpop.f32.mrb[0].mxu0
  %732 = vmatprep.mubr.bf16.mxu0 0
  %733 = vmatmul.mubr.bf16.gmra.mrb[0].mxu0 %v621
  %v734 = vpop.f32.mrb[0].mxu0
  %v735 = vadd.f32 0.0, %v734
  %v736 = vpop.f32.mrb[0].mxu0
  %v737 = vpop.f32.mrb[0].mxu0
  %v738 = vadd.f32 0.0, %v737
  %v739 = vpop.f32.mrb[0].mxu0
  %740 = vmatprep.mubr.bf16.mxu0 0
  %741 = vmatmul.mubr.bf16.gmra.mrb[0].mxu0 %v622
  %v742 = vpop.f32.mrb[0].mxu0
  %v743 = vadd.f32 0.0, %v742
  %v744 = vpop.f32.mrb[0].mxu0
  %v745 = vpop.f32.mrb[0].mxu0
  %v746 = vadd.f32 0.0, %v745
  %v747 = vpop.f32.mrb[0].mxu0
  %748 = vdwg.mxu0
  %v749 = vadd.f32 %v560, %v711
  %v750 = vadd.f32 %v561, %v714
  %v751 = vadd.f32 %v562, %v719
  %v752 = vadd.f32 %v563, %v722
  %v753 = vadd.f32 %v564, %v727
  %v754 = vadd.f32 %v565, %v730
  %v755 = vadd.f32 %v566, %v735
  %v756 = vadd.f32 %v567, %v738
  %v757 = vadd.f32 %v568, %v743
  %v758 = vadd.f32 %v569, %v746
  %v759 = vmax.f32 %v749, %v753
  %v760 = vmax.f32 %v751, %v755
  %v761 = vmax.f32 %v759, %v757
  %v762 = vmax.f32 %v761, %v760
  %v763 = vmax.f32 %v750, %v754
  %v764 = vmax.f32 %v752, %v756
  %v765 = vmax.f32 %v763, %v758
  %v766 = vmax.f32 %v765, %v764
  %s767 = scalar_lea.vmem %s0, 40
  %v768 = vld [vmem:[%s767] sm:$0xf]
  %v769 = vld [vmem:[%s767 + $0x4] sm:$0xf]
  %v770 = vld [vmem:[%s767 + $0x8] sm:$0xf]
  %v771 = vld [vmem:[%s767 + $0xc] sm:$0xf]
  %s772 = scalar_lea.vmem %s0, 48
  %v773 = vld [vmem:[%s772] sm:$0xf]
  %v774 = vld [vmem:[%s772 + $0x4] sm:$0xf]
  %v775 = vld [vmem:[%s772 + $0x8] sm:$0xf]
  %v776 = vld [vmem:[%s772 + $0xc] sm:$0xf]
  %v781 = vunpack.c.l.b16 %v773
  %v782 = vunpack.c.l.b16 %v774
  %v783 = vunpack.c.l.b16 %v775
  %v784 = vunpack.c.l.b16 %v776
  %v785 = vpack.c.b16 %v782, %v781
  %v786 = vpack.c.b16 %v784, %v783
  %789 = vmatprep.subr.bf16.mxu0 0
  %790 = vmatpush1.bf16.msra.mxu0 %v141
  %791 = vmatprep.subr.bf16.mxu0 0
  %792 = vmatpush1.bf16.msra.mxu0 %v142
  %793 = vmatprep.subr.bf16.mxu0 0
  %794 = vmatpush1.bf16.msra.mxu0 %v143
  %795 = vmatprep.subr.bf16.mxu0 0
  %796 = vmatpush1.bf16.msra.mxu0 %v144
  %797 = vmatprep.subr.bf16.mxu0 0
  %798 = vmatpush1.bf16.msra.mxu0 %v145
  %799 = vmatprep.subr.bf16.mxu0 0
  %800 = vmatpush1.bf16.msra.mxu0 %v146
  %801 = vmatprep.subr.bf16.mxu0 0
  %802 = vmatpush1.bf16.msra.mxu0 %v147
  %803 = vmatprep.subr.bf16.mxu0 0
  %804 = vmatpush1.bf16.msra.mxu0 %v148
  %805 = vmatprep.subr.bf16.mxu0 0
  %806 = vmatpush1.bf16.msra.mxu0 0
  %807 = vmatprep.subr.bf16.mxu0 0
  %808 = vmatpush1.bf16.msra.mxu0 0
  %809 = vmatprep.subr.bf16.mxu0 0
  %810 = vmatpush1.bf16.msra.mxu0 0
  %811 = vmatprep.subr.bf16.mxu0 0
  %812 = vmatpush1.bf16.msra.mxu0 0
  %813 = vmatprep.subr.bf16.mxu0 0
  %814 = vmatpush1.bf16.msra.mxu0 0
  %815 = vmatprep.subr.bf16.mxu0 0
  %816 = vmatpush1.bf16.msra.mxu0 0
  %817 = vmatprep.subr.bf16.mxu0 0
  %818 = vmatpush1.bf16.msra.mxu0 0
  %819 = vmatprep.subr.bf16.mxu0 0
  %820 = vmatpush1.bf16.msra.mxu0 0
  %821 = vmatprep.mubr.bf16.mxu0 0
  %822 = vmatmul.mubr.bf16.gmra.mrb[0].mxu0 %v785
  %v823 = vpop.f32.mrb[0].mxu0
  %v824 = vadd.f32 0.0, %v823
  %v825 = vpop.f32.mrb[0].mxu0
  %v826 = vpop.f32.mrb[0].mxu0
  %v827 = vadd.f32 0.0, %v826
  %v828 = vpop.f32.mrb[0].mxu0
  %829 = vmatprep.mubr.bf16.mxu0 0
  %830 = vmatmul.mubr.bf16.gmra.mrb[0].mxu0 %v786
  %v831 = vpop.f32.mrb[0].mxu0
  %v832 = vadd.f32 0.0, %v831
  %v833 = vpop.f32.mrb[0].mxu0
  %v834 = vpop.f32.mrb[0].mxu0
  %v835 = vadd.f32 0.0, %v834
  %v836 = vpop.f32.mrb[0].mxu0
  %837 = vdwg.mxu0
  %v842 = vunpack.c.l.b16 %v768
  %v843 = vunpack.c.l.b16 %v769
  %v844 = vunpack.c.l.b16 %v770
  %v845 = vunpack.c.l.b16 %v771
  %v846 = vpack.c.b16 %v843, %v842
  %v847 = vpack.c.b16 %v845, %v844
  %850 = vmatprep.subr.bf16.mxu0 0
  %851 = vmatpush1.bf16.msra.mxu0 %v292
  %852 = vmatprep.subr.bf16.mxu0 0
  %853 = vmatpush1.bf16.msra.mxu0 %v293
  %854 = vmatprep.subr.bf16.mxu0 0
  %855 = vmatpush1.bf16.msra.mxu0 %v294
  %856 = vmatprep.subr.bf16.mxu0 0
  %857 = vmatpush1.bf16.msra.mxu0 %v295
  %858 = vmatprep.subr.bf16.mxu0 0
  %859 = vmatpush1.bf16.msra.mxu0 %v296
  %860 = vmatprep.subr.bf16.mxu0 0
  %861 = vmatpush1.bf16.msra.mxu0 %v297
  %862 = vmatprep.subr.bf16.mxu0 0
  %863 = vmatpush1.bf16.msra.mxu0 %v298
  %864 = vmatprep.subr.bf16.mxu0 0
  %865 = vmatpush1.bf16.msra.mxu0 %v299
  %866 = vmatprep.subr.bf16.mxu0 0
  %867 = vmatpush1.bf16.msra.mxu0 0
  %868 = vmatprep.subr.bf16.mxu0 0
  %869 = vmatpush1.bf16.msra.mxu0 0
  %870 = vmatprep.subr.bf16.mxu0 0
  %871 = vmatpush1.bf16.msra.mxu0 0
  %872 = vmatprep.subr.bf16.mxu0 0
  %873 = vmatpush1.bf16.msra.mxu0 0
  %874 = vmatprep.subr.bf16.mxu0 0
  %875 = vmatpush1.bf16.msra.mxu0 0
  %876 = vmatprep.subr.bf16.mxu0 0
  %877 = vmatpush1.bf16.msra.mxu0 0
  %878 = vmatprep.subr.bf16.mxu0 0
  %879 = vmatpush1.bf16.msra.mxu0 0
  %880 = vmatprep.subr.bf16.mxu0 0
  %881 = vmatpush1.bf16.msra.mxu0 0
  %882 = vmatprep.mubr.bf16.mxu0 0
  %883 = vmatmul.mubr.bf16.gmra.mrb[0].mxu0 %v846
  %v884 = vpop.f32.mrb[0].mxu0
  %v885 = vadd.f32 %v824, %v884
  %v886 = vpop.f32.mrb[0].mxu0
  %v887 = vpop.f32.mrb[0].mxu0
  %v888 = vadd.f32 %v827, %v887
  %v889 = vpop.f32.mrb[0].mxu0
  %890 = vmatprep.mubr.bf16.mxu0 0
  %891 = vmatmul.mubr.bf16.gmra.mrb[0].mxu0 %v847
  %v892 = vpop.f32.mrb[0].mxu0
  %v893 = vadd.f32 %v832, %v892
  %v894 = vpop.f32.mrb[0].mxu0
  %v895 = vpop.f32.mrb[0].mxu0
  %v896 = vadd.f32 %v835, %v895
  %v897 = vpop.f32.mrb[0].mxu0
  %898 = vdwg.mxu0
  %v899 = vmax.f32 %v885, %v893
  %v900 = vmax.f32 %v888, %v896
  %v901 = vld [vmem:[%s4] sm:$0x1]
  %v903 = vlaneseq
  %v904 = vshrl.u32 %v903, 7
  %v905 = vsub.s32 0, %v904
  %v906 = vrot.slane %v901, %v905
  %v908 = vadd.f32 %v899, %v906
  %v909 = vadd.f32 %v900, %v906
  %v910 = vmax.f32 %v762, %v908
  %v911 = vmax.f32 %v766, %v909
  %v912 = vld [vmem:[%s2] sm:$0x1]
  %v914 = vlaneseq
  %v915 = vshrl.u32 %v914, 7
  %v916 = vsub.s32 0, %v915
  %v917 = vrot.slane %v912, %v916
  %v919 = vadd.f32 %v910, %v917
  %v920 = vadd.f32 %v911, %v917
  %v921 = vmax.f32 %v919, 0.0
  %v922 = vmax.f32 %v920, 0.0
  %v923 = vld [vmem:[%s3] sm:$0xff]
  %s924 = sld [smem:[#allocation2]]
  %v925 = vstv %s924
  %926 = vmatprep.subr.mxu0 0.0
  %927 = vmatpush1.xpose.msra.mxu0 %v921
  %928 = vmatprep.subr.mxu0 0.0
  %929 = vmatpush1.xpose.msra.mxu0 %v922
  %930 = vmatprep.subr.mxu0 0.0
  %931 = vmatpush1.xpose.msra.mxu0 0.0
  %932 = vmatprep.subr.mxu0 0.0
  %933 = vmatpush1.xpose.msra.mxu0 0.0
  %934 = vmatprep.subr.mxu0 0.0
  %935 = vmatpush1.xpose.msra.mxu0 0.0
  %936 = vmatprep.subr.mxu0 0.0
  %937 = vmatpush1.xpose.msra.mxu0 0.0
  %938 = vmatprep.subr.mxu0 0.0
  %939 = vmatpush1.xpose.msra.mxu0 0.0
  %940 = vmatprep.subr.mxu0 0.0
  %941 = vmatpush1.xpose.msra.mxu0 0.0
  %942 = vmatprep.subr.mxu0 0.0
  %943 = vmatpush1.xpose.msra.mxu0 0.0
  %944 = vmatprep.subr.mxu0 0.0
  %945 = vmatpush1.xpose.msra.mxu0 0.0
  %946 = vmatprep.subr.mxu0 0.0
  %947 = vmatpush1.xpose.msra.mxu0 0.0
  %948 = vmatprep.subr.mxu0 0.0
  %949 = vmatpush1.xpose.msra.mxu0 0.0
  %950 = vmatprep.subr.mxu0 0.0
  %951 = vmatpush1.xpose.msra.mxu0 0.0
  %952 = vmatprep.subr.mxu0 0.0
  %953 = vmatpush1.xpose.msra.mxu0 0.0
  %954 = vmatprep.subr.mxu0 0.0
  %955 = vmatpush1.xpose.msra.mxu0 0.0
  %956 = vmatprep.subr.mxu0 0.0
  %957 = vmatpush1.xpose.msra.mxu0 0.0
  %958 = vmatprep.subr.mxu0 0.0
  %959 = vmatpush1.xpose.msra.mxu0 0.0
  %960 = vmatprep.subr.mxu0 0.0
  %961 = vmatpush1.xpose.msra.mxu0 0.0
  %962 = vmatprep.subr.mxu0 0.0
  %963 = vmatpush1.xpose.msra.mxu0 0.0
  %964 = vmatprep.subr.mxu0 0.0
  %965 = vmatpush1.xpose.msra.mxu0 0.0
  %966 = vmatprep.subr.mxu0 0.0
  %967 = vmatpush1.xpose.msra.mxu0 0.0
  %968 = vmatprep.subr.mxu0 0.0
  %969 = vmatpush1.xpose.msra.mxu0 0.0
  %970 = vmatprep.subr.mxu0 0.0
  %971 = vmatpush1.xpose.msra.mxu0 0.0
  %972 = vmatprep.subr.mxu0 0.0
  %973 = vmatpush1.xpose.msra.mxu0 0.0
  %974 = vmatprep.subr.mxu0 0.0
  %975 = vmatpush1.xpose.msra.mxu0 0.0
  %976 = vmatprep.subr.mxu0 0.0
  %977 = vmatpush1.xpose.msra.mxu0 0.0
  %978 = vmatprep.subr.mxu0 0.0
  %979 = vmatpush1.xpose.msra.mxu0 0.0
  %980 = vmatprep.subr.mxu0 0.0
  %981 = vmatpush1.xpose.msra.mxu0 0.0
  %982 = vmatprep.subr.mxu0 0.0
  %983 = vmatpush1.xpose.msra.mxu0 0.0
  %984 = vmatprep.subr.mxu0 0.0
  %985 = vmatpush1.xpose.msra.mxu0 0.0
  %986 = vmatprep.subr.mxu0 0.0
  %987 = vmatpush1.xpose.msra.mxu0 0.0
  %988 = vmatprep.subr.mxu0 0.0
  %989 = vmatpush1.xpose.msra.mxu0 0.0
  %990 = vmatprep.mubr.f32.mxu0 0.0
  %991 = vmatmul.mubr.f32.gmra.mrb[0].mxu0 %v923
  %v992 = vpop.f32.mrb[0].mxu0
  %v993 = vadd.f32 %v925, %v992
  %v994 = vpop.f32.mrb[0].mxu0
  %995 = vdwg.mxu0
  %v996 = vxor.u32 %v993, 2147483648
  %v997 = vmul.f32 %v996, 1.442695
  %v998 = vpow.pop %v997
  %v999 = vadd.f32 %v998, 1.0
  %v1000 = vrcp.pop %v999
  %v1001 = vmul.f32 1.0, %v1000
  %vm1002 = vcmask 130048
  %1003 = vst.msk [vmem:[%s6] sm:$0xff] %vm1002, %v1001
  // Predicated region
  $region26: #{cnn_forward.1} parent=0 // pred_check
    _
  $region27: #{cnn_forward.1} parent=0 // pred_check_branch
    %1005 = sbr.rel (0) target = $region29
  $region28: #{cnn_forward.1} parent=0 // pred_region
    _
  $region29: #{cnn_forward.1} parent=0 // pred_fallthru
    _
  // Predicated region
  $region30: #{cnn_forward.1} parent=0 // pred_check
    _
  $region31: #{cnn_forward.1} parent=0 // pred_check_branch
    %1007 = sbr.rel (0) target = $region33
  $region32: #{cnn_forward.1} parent=0 // pred_region
    _
  $region33: #{cnn_forward.1} parent=0 // pred_fallthru
    _

</llo_original>
